<compile_context>
chip_gen: v7x
topology: tpu7x:2x2x1
jax: 0.10.0
libtpu: 0.0.40
codegen_flags: <defaults>
</compile_context>

<pallas_src>
import jax
import jax.numpy as jnp
from jax.experimental import pallas as pl
from jax.experimental.pallas import tpu as pltpu


def _round_up(x: int, m: int) -> int:
    return (x + m - 1) // m * m


def _dual_attention_kernel(hist_ref, ctx_ref, mask_ref,
                           wh_ref, wc_ref, v_ref,
                           out_ref):
    Bt, S, H = hist_ref.shape
    A2 = wh_ref.shape[1]

    h = hist_ref[...]                                    # (Bt, S, H)

    # ---- fused projections for both heads (MXU) -------------------------
    # NOTE: the reshape is layout-free when S % 8 == 0 (f32 sublane); for
    # other S it is still correct (Mosaic inserts a small relayout copy).
    h_att = jnp.dot(h.reshape(Bt * S, H), wh_ref[...],
                    preferred_element_type=jnp.float32)  # (Bt*S, 2A)
    h_att = h_att.reshape(Bt, S, A2)
    c_att = jnp.dot(ctx_ref[...], wc_ref[...],
                    preferred_element_type=jnp.float32)  # (Bt, 2A)
    t = jnp.tanh(h_att + c_att[:, None, :])              # (Bt, S, 2A)

    # ---- score = <tanh(.), v> via full-lane multiply + lane reduction ----
    # v_ref rows are lane-masked: row 0 = [v_a | 0], row 1 = [0 | v_b], so no
    # slice at the (unaligned) lane offset A is needed.
    v_a = v_ref[0:1, :].reshape(1, 1, A2)
    v_b = v_ref[1:2, :].reshape(1, 1, A2)
    s_a = jnp.sum(t * v_a, axis=-1)                      # (Bt, S)
    s_b = jnp.sum(t * v_b, axis=-1)                      # (Bt, S)

    # masks packed as [a_mask | b_mask] along lanes (1.0 = valid position).
    valid_a = mask_ref[:, :S] > 0.5                      # (Bt, S) bool
    valid_b = mask_ref[:, S:] > 0.5

    def masked_softmax(s, valid):
        # masked_fill(~mask, -inf) -> softmax over S -> masked_fill(~mask, 0)
        s = jnp.where(valid, s, -jnp.inf)
        m = jnp.max(s, axis=-1, keepdims=True)
        e = jnp.exp(s - m)
        denom = jnp.sum(e, axis=-1, keepdims=True)
        p = e * pl.reciprocal(denom)                     # exact (1e-5 parity)
        return jnp.where(valid, p, 0.0)

    p_a = masked_softmax(s_a, valid_a)                   # (Bt, S)
    p_b = masked_softmax(s_b, valid_b)

    # ---- weighted reduction over history ---------------------------------
    att_a = jnp.sum(p_a[:, :, None] * h, axis=1)         # (Bt, H)
    att_b = jnp.sum(p_b[:, :, None] * h, axis=1)         # (Bt, H)

    # single lane-dense output slab: [att_a | att_b | p_a | p_b]
    out_ref[:, 0:H] = att_a
    out_ref[:, H:2 * H] = att_b
    out_ref[:, 2 * H:2 * H + S] = p_a
    out_ref[:, 2 * H + S:] = p_b


def _pick_bt(B: int, S: int) -> int:
    """Rows per grid step from a VMEM budget (lane dims pad to 128 in VMEM)."""
    per_row = 4 * (S * 128 + 3 * 128)            # hist + ctx + mask + out slab
    cap = (8 << 20) // (2 * per_row)             # ~8 MiB of double-buffered blocks
    cap = max(8, min(1024, (cap // 8) * 8))
    if B <= cap:
        if B >= 16:
            # >= 2 grid steps so the "parallel" batch axis can use both v7x TCs.
            return min(cap, _round_up(pl.cdiv(B, 2), 8))
        return B                                 # single full-dim block
    return cap


@jax.jit
def dual_attention(history, context, a_mask, b_mask, params):
    """history (B,S,H) f32, context (B,C) f32, a_mask/b_mask (B,S) bool (True=valid).

    Returns (att (B, 2H), (a_scores (B,1,S), b_scores (B,1,S))).
    """
    B, S, H = history.shape
    C = context.shape[-1]
    A = params["wh_a"].shape[1]
    W = 2 * H + 2 * S                            # fused output slab width

    # Fuse both heads' weights: one (H, 2A) / (C, 2A) matmul each.
    wh = jnp.concatenate([params["wh_a"], params["wh_b"]], axis=1)
    wc = jnp.concatenate([params["wc_a"], params["wc_b"]], axis=1)
    # Lane-masked score vectors: row 0 = [v_a | 0], row 1 = [0 | v_b].
    zA = jnp.zeros((1, A), jnp.float32)
    v = jnp.concatenate([
        jnp.concatenate([params["v_a"].T, zA], axis=1),
        jnp.concatenate([zA, params["v_b"].T], axis=1),
    ], axis=0)                                   # (2, 2A)

    # Pack both masks into one lane-dense (B, 2S) float array (True = valid).
    masks = jnp.concatenate([a_mask, b_mask], axis=-1).astype(jnp.float32)

    hist = history.astype(jnp.float32)
    ctx = context.astype(jnp.float32)

    Bt = _pick_bt(B, S)
    grid = (pl.cdiv(B, Bt),)                     # partial last block: no padding

    # Explicit VMEM budget: double-buffered blocks + resident weights + slack.
    def _lane(n): return _round_up(n, 128)
    def _sub(n): return _round_up(n, 8)
    block_bytes = 4 * (Bt * _sub(S) * _lane(H)
                       + _sub(Bt) * (_lane(C) + _lane(2 * S) + _lane(W)))
    weight_bytes = 4 * (_sub(H) + _sub(C) + _sub(2)) * _lane(2 * A)
    vmem_limit = int(min(32 << 20,
                         max(16 << 20, 2 * (block_bytes + weight_bytes) + (4 << 20))))

    out = pl.pallas_call(
        _dual_attention_kernel,
        out_shape=jax.ShapeDtypeStruct((B, W), jnp.float32),
        grid_spec=pltpu.PrefetchScalarGridSpec(
            num_scalar_prefetch=0,
            grid=grid,
            in_specs=[
                pl.BlockSpec((Bt, S, H), lambda b: (b, 0, 0)),   # history tile
                pl.BlockSpec((Bt, C), lambda b: (b, 0)),         # context tile
                pl.BlockSpec((Bt, 2 * S), lambda b: (b, 0)),     # packed masks
                # Weights: same block every step -> kept resident in VMEM.
                pl.BlockSpec((H, 2 * A), lambda b: (0, 0)),
                pl.BlockSpec((C, 2 * A), lambda b: (0, 0)),
                pl.BlockSpec((2, 2 * A), lambda b: (0, 0)),
            ],
            out_specs=pl.BlockSpec((Bt, W), lambda b: (b, 0)),
        ),
        compiler_params=pltpu.CompilerParams(
            dimension_semantics=("parallel",),    # batch axis: megacore-shardable
            vmem_limit_bytes=vmem_limit),
    )(hist, ctx, masks, wh, wc, v)

    att = out[:, :2 * H]                          # (B, 2H) = [a_att | b_att]
    a_scores = out[:, 2 * H:2 * H + S][:, None, :]   # (B, 1, S)
    b_scores = out[:, 2 * H + S:][:, None, :]
    return att, (a_scores, b_scores)


def _reference(history, context, a_mask, b_mask, params):
    """Pure-JAX reference mirroring the PyTorch forward (att strategy, softmax)."""
    def one(history, context, mask, wh, wc, v):
        h_att = history @ wh                       # (B,S,A)
        c_att = (context @ wc)[:, None, :]         # (B,1,A)
        score = jnp.tanh(h_att + c_att) @ v        # (B,S,1)
        fill = ~mask[..., None]                    # True where invalid
        score = jnp.where(fill, -jnp.inf, score)
        score = jax.nn.softmax(score, axis=1)
        score = jnp.where(fill, 0.0, score)
        score = jnp.swapaxes(score, 1, 2)          # (B,1,S)
        att = jnp.einsum("bos,bsh->boh", score, history)[:, 0, :]
        return att, score

    a_att, a_s = one(history, context, a_mask,
                     params["wh_a"], params["wc_a"], params["v_a"])
    b_att, b_s = one(history, context, b_mask,
                     params["wh_b"], params["wc_b"], params["v_b"])
    return jnp.concatenate([a_att, b_att], axis=-1), (a_s, b_s)


def _check(history, context, a_mask, b_mask, params):
    att, (a_scores, b_scores) = dual_attention(history, context, a_mask, b_mask, params)
    jax.block_until_ready(att)
    ref_att, (ref_a, ref_b) = _reference(history, context, a_mask, b_mask, params)
    B, S, H = history.shape
    assert att.shape == (B, 2 * H)
    assert a_scores.shape == (B, 1, S) and b_scores.shape == (B, 1, S)
    assert jnp.allclose(att, ref_att, rtol=1e-5, atol=1e-5)
    assert jnp.allclose(a_scores, ref_a, rtol=1e-5, atol=1e-5)
    assert jnp.allclose(b_scores, ref_b, rtol=1e-5, atol=1e-5)


if __name__ == "__main__":
    B, S, H_IN, C_DIM, A_DIM = 2, 8, 32, 16, 32

    key = jax.random.PRNGKey(0)
    k = jax.random.split(key, 12)

    history = jax.random.normal(k[0], (B, S, H_IN), dtype=jnp.float32)
    context = jax.random.normal(k[1], (B, C_DIM), dtype=jnp.float32)

    # nn.Linear weights stored already transposed: torch weight (out,in) ->
    # here (in,out) so that x @ W matches x @ weight.T
    params = {
        "wh_a": jax.random.normal(k[2], (H_IN, A_DIM), dtype=jnp.float32) * 0.1,
        "wc_a": jax.random.normal(k[3], (C_DIM, A_DIM), dtype=jnp.float32) * 0.1,
        "v_a":  jax.random.normal(k[4], (A_DIM, 1), dtype=jnp.float32) * 0.1,
        "wh_b": jax.random.normal(k[5], (H_IN, A_DIM), dtype=jnp.float32) * 0.1,
        "wc_b": jax.random.normal(k[6], (C_DIM, A_DIM), dtype=jnp.float32) * 0.1,
        "v_b":  jax.random.normal(k[7], (A_DIM, 1), dtype=jnp.float32) * 0.1,
    }

    # boolean masks, True = valid (forward applies ~mask)
    idx = jnp.arange(S)
    a_mask = jnp.stack([idx < 5, idx < 7])            # (B, S)
    b_mask = jnp.stack([idx >= 2, idx >= 1])          # (B, S)
    _check(history, context, a_mask, b_mask, params)

    # Second case: larger batch -> multi-step grid with a ragged last block
    # (exercises the no-padding path: 20 rows, Bt=16, partial block of 4).
    B2 = 20
    history2 = jax.random.normal(k[8], (B2, S, H_IN), dtype=jnp.float32)
    context2 = jax.random.normal(k[9], (B2, C_DIM), dtype=jnp.float32)
    a_mask2 = jax.random.bernoulli(k[10], 0.7, (B2, S)).at[:, 0].set(True)
    b_mask2 = jax.random.bernoulli(k[11], 0.7, (B2, S)).at[:, 0].set(True)
    _check(history2, context2, a_mask2, b_mask2, params)

    print("KERNEL_OK")
</pallas_src>

<mosaic_0001>
module attributes {stable_mosaic.version = 11 : i64} {
  func.func @_dual_attention_kernel(%arg0: i32, %arg1: memref<2x8x32xf32, #tpu.memory_space<vmem>>, %arg2: memref<2x16xf32, #tpu.memory_space<vmem>>, %arg3: memref<2x16xf32, #tpu.memory_space<vmem>>, %arg4: memref<32x64xf32, #tpu.memory_space<vmem>>, %arg5: memref<16x64xf32, #tpu.memory_space<vmem>>, %arg6: memref<2x64xf32, #tpu.memory_space<vmem>>, %arg7: memref<2x80xf32, #tpu.memory_space<vmem>>) attributes {dimension_semantics = [#tpu.dimension_semantics<parallel>], iteration_bounds = array<i64: 1>, scalar_prefetch = 0 : i64, scratch_operands = 0 : i64, tpu.core_type = #tpu.core_type<tc>, window_params = [{transform_indices = @transform_0, window_bounds = array<i64: 2, 8, 32>}, {transform_indices = @transform_1, window_bounds = array<i64: 2, 16>}, {transform_indices = @transform_2, window_bounds = array<i64: 2, 16>}, {pipeline_mode = #tpu.pipeline_mode<synchronous>, transform_indices = @transform_3, window_bounds = array<i64: 32, 64>}, {pipeline_mode = #tpu.pipeline_mode<synchronous>, transform_indices = @transform_4, window_bounds = array<i64: 16, 64>}, {pipeline_mode = #tpu.pipeline_mode<synchronous>, transform_indices = @transform_5, window_bounds = array<i64: 2, 64>}, {transform_indices = @transform_6, window_bounds = array<i64: 2, 80>}]} {
    %c0 = arith.constant 0 : index
    %c0_0 = arith.constant 0 : index
    %c0_1 = arith.constant 0 : index
    %0 = vector.load %arg1[%c0, %c0_0, %c0_1] : memref<2x8x32xf32, #tpu.memory_space<vmem>>, vector<2x8x32xf32>
    %1 = vector.shape_cast %0 : vector<2x8x32xf32> to vector<16x32xf32>
    %c0_2 = arith.constant 0 : index
    %c0_3 = arith.constant 0 : index
    %2 = vector.load %arg4[%c0_2, %c0_3] : memref<32x64xf32, #tpu.memory_space<vmem>>, vector<32x64xf32>
    %cst = arith.constant dense<0.000000e+00> : vector<16x64xf32>
    %3 = tpu.matmul %1, %2, %cst {dimension_numbers = #tpu.dot_dimension_numbers<[1], [0], [0], [1], [0, 0, 1, 1], [], []>} : vector<16x32xf32>, vector<32x64xf32>, vector<16x64xf32> -> vector<16x64xf32>
    %4 = vector.shape_cast %3 : vector<16x64xf32> to vector<2x8x64xf32>
    %c0_4 = arith.constant 0 : index
    %c0_5 = arith.constant 0 : index
    %5 = vector.load %arg2[%c0_4, %c0_5] : memref<2x16xf32, #tpu.memory_space<vmem>>, vector<2x16xf32>
    %c0_6 = arith.constant 0 : index
    %c0_7 = arith.constant 0 : index
    %6 = vector.load %arg5[%c0_6, %c0_7] : memref<16x64xf32, #tpu.memory_space<vmem>>, vector<16x64xf32>
    %cst_8 = arith.constant dense<0.000000e+00> : vector<2x64xf32>
    %7 = tpu.matmul %5, %6, %cst_8 {dimension_numbers = #tpu.dot_dimension_numbers<[1], [0], [0], [1], [0, 0, 1, 1], [], []>} : vector<2x16xf32>, vector<16x64xf32>, vector<2x64xf32> -> vector<2x64xf32>
    %8 = vector.shape_cast %7 : vector<2x64xf32> to vector<2x1x64xf32>
    %9 = vector.broadcast %8 : vector<2x1x64xf32> to vector<2x8x64xf32>
    %10 = arith.addf %4, %9 : vector<2x8x64xf32>
    %11 = math.tanh %10 : vector<2x8x64xf32>
    %c0_9 = arith.constant 0 : index
    %c0_10 = arith.constant 0 : index
    %12 = vector.load %arg6[%c0_9, %c0_10] : memref<2x64xf32, #tpu.memory_space<vmem>>, vector<1x64xf32>
    %13 = vector.shape_cast %12 : vector<1x64xf32> to vector<1x1x64xf32>
    %c1 = arith.constant 1 : index
    %c0_11 = arith.constant 0 : index
    %14 = vector.load %arg6[%c1, %c0_11] : memref<2x64xf32, #tpu.memory_space<vmem>>, vector<1x64xf32>
    %15 = vector.shape_cast %14 : vector<1x64xf32> to vector<1x1x64xf32>
    %16 = vector.broadcast %13 : vector<1x1x64xf32> to vector<2x8x64xf32>
    %17 = arith.mulf %11, %16 : vector<2x8x64xf32>
    %cst_12 = arith.constant dense<0.000000e+00> : vector<2x8xf32>
    %18 = vector.multi_reduction <add>, %17, %cst_12 [2] : vector<2x8x64xf32> to vector<2x8xf32>
    %19 = vector.broadcast %15 : vector<1x1x64xf32> to vector<2x8x64xf32>
    %20 = arith.mulf %11, %19 : vector<2x8x64xf32>
    %cst_13 = arith.constant dense<0.000000e+00> : vector<2x8xf32>
    %21 = vector.multi_reduction <add>, %20, %cst_13 [2] : vector<2x8x64xf32> to vector<2x8xf32>
    %c0_14 = arith.constant 0 : index
    %c0_15 = arith.constant 0 : index
    %22 = vector.load %arg3[%c0_14, %c0_15] : memref<2x16xf32, #tpu.memory_space<vmem>>, vector<2x8xf32>
    %cst_16 = arith.constant 5.000000e-01 : f32
    %23 = vector.broadcast %cst_16 : f32 to vector<2x8xf32>
    %24 = arith.cmpf ogt, %22, %23 : vector<2x8xf32>
    %c0_17 = arith.constant 0 : index
    %c8 = arith.constant 8 : index
    %25 = vector.load %arg3[%c0_17, %c8] : memref<2x16xf32, #tpu.memory_space<vmem>>, vector<2x8xf32>
    %cst_18 = arith.constant 5.000000e-01 : f32
    %26 = vector.broadcast %cst_18 : f32 to vector<2x8xf32>
    %27 = arith.cmpf ogt, %25, %26 : vector<2x8xf32>
    %cst_19 = arith.constant 0xFF800000 : f32
    %28 = vector.broadcast %cst_19 : f32 to vector<2x8xf32>
    %29 = arith.select %24, %18, %28 : vector<2x8xi1>, vector<2x8xf32>
    %cst_20 = arith.constant dense<0xFF800000> : vector<2xf32>
    %30 = vector.multi_reduction <maximumf>, %29, %cst_20 [1] : vector<2x8xf32> to vector<2xf32>
    %31 = vector.shape_cast %30 : vector<2xf32> to vector<2x1xf32>
    %32 = vector.broadcast %31 : vector<2x1xf32> to vector<2x8xf32>
    %33 = arith.subf %29, %32 : vector<2x8xf32>
    %34 = math.exp %33 : vector<2x8xf32>
    %cst_21 = arith.constant dense<0.000000e+00> : vector<2xf32>
    %35 = vector.multi_reduction <add>, %34, %cst_21 [1] : vector<2x8xf32> to vector<2xf32>
    %36 = vector.shape_cast %35 : vector<2xf32> to vector<2x1xf32>
    %37 = tpu.reciprocal %36 : vector<2x1xf32> -> vector<2x1xf32>
    %38 = vector.broadcast %37 : vector<2x1xf32> to vector<2x8xf32>
    %39 = arith.mulf %34, %38 : vector<2x8xf32>
    %cst_22 = arith.constant 0.000000e+00 : f32
    %40 = vector.broadcast %cst_22 : f32 to vector<2x8xf32>
    %41 = arith.select %24, %39, %40 : vector<2x8xi1>, vector<2x8xf32>
    %cst_23 = arith.constant 0xFF800000 : f32
    %42 = vector.broadcast %cst_23 : f32 to vector<2x8xf32>
    %43 = arith.select %27, %21, %42 : vector<2x8xi1>, vector<2x8xf32>
    %cst_24 = arith.constant dense<0xFF800000> : vector<2xf32>
    %44 = vector.multi_reduction <maximumf>, %43, %cst_24 [1] : vector<2x8xf32> to vector<2xf32>
    %45 = vector.shape_cast %44 : vector<2xf32> to vector<2x1xf32>
    %46 = vector.broadcast %45 : vector<2x1xf32> to vector<2x8xf32>
    %47 = arith.subf %43, %46 : vector<2x8xf32>
    %48 = math.exp %47 : vector<2x8xf32>
    %cst_25 = arith.constant dense<0.000000e+00> : vector<2xf32>
    %49 = vector.multi_reduction <add>, %48, %cst_25 [1] : vector<2x8xf32> to vector<2xf32>
    %50 = vector.shape_cast %49 : vector<2xf32> to vector<2x1xf32>
    %51 = tpu.reciprocal %50 : vector<2x1xf32> -> vector<2x1xf32>
    %52 = vector.broadcast %51 : vector<2x1xf32> to vector<2x8xf32>
    %53 = arith.mulf %48, %52 : vector<2x8xf32>
    %cst_26 = arith.constant 0.000000e+00 : f32
    %54 = vector.broadcast %cst_26 : f32 to vector<2x8xf32>
    %55 = arith.select %27, %53, %54 : vector<2x8xi1>, vector<2x8xf32>
    %56 = vector.shape_cast %41 : vector<2x8xf32> to vector<2x8x1xf32>
    %57 = vector.broadcast %56 : vector<2x8x1xf32> to vector<2x8x32xf32>
    %58 = arith.mulf %57, %0 : vector<2x8x32xf32>
    %cst_27 = arith.constant dense<0.000000e+00> : vector<2x32xf32>
    %59 = vector.multi_reduction <add>, %58, %cst_27 [1] : vector<2x8x32xf32> to vector<2x32xf32>
    %60 = vector.shape_cast %55 : vector<2x8xf32> to vector<2x8x1xf32>
    %61 = vector.broadcast %60 : vector<2x8x1xf32> to vector<2x8x32xf32>
    %62 = arith.mulf %61, %0 : vector<2x8x32xf32>
    %cst_28 = arith.constant dense<0.000000e+00> : vector<2x32xf32>
    %63 = vector.multi_reduction <add>, %62, %cst_28 [1] : vector<2x8x32xf32> to vector<2x32xf32>
    %c0_29 = arith.constant 0 : index
    %c0_30 = arith.constant 0 : index
    %64 = vector.load %arg7[%c0_29, %c0_30] : memref<2x80xf32, #tpu.memory_space<vmem>>, vector<2x32xf32>
    tpu.vector_store %arg7[%c0_29, %c0_30], %59 {strides = array<i32>} : memref<2x80xf32, #tpu.memory_space<vmem>>, vector<2x32xf32>,
    %c0_31 = arith.constant 0 : index
    %c32 = arith.constant 32 : index
    %65 = vector.load %arg7[%c0_31, %c32] : memref<2x80xf32, #tpu.memory_space<vmem>>, vector<2x32xf32>
    tpu.vector_store %arg7[%c0_31, %c32], %63 {strides = array<i32>} : memref<2x80xf32, #tpu.memory_space<vmem>>, vector<2x32xf32>,
    %c0_32 = arith.constant 0 : index
    %c64 = arith.constant 64 : index
    %66 = vector.load %arg7[%c0_32, %c64] : memref<2x80xf32, #tpu.memory_space<vmem>>, vector<2x8xf32>
    tpu.vector_store %arg7[%c0_32, %c64], %41 {strides = array<i32>} : memref<2x80xf32, #tpu.memory_space<vmem>>, vector<2x8xf32>,
    %c0_33 = arith.constant 0 : index
    %c72 = arith.constant 72 : index
    %67 = vector.load %arg7[%c0_33, %c72] : memref<2x80xf32, #tpu.memory_space<vmem>>, vector<2x8xf32>
    tpu.vector_store %arg7[%c0_33, %c72], %55 {strides = array<i32>} : memref<2x80xf32, #tpu.memory_space<vmem>>, vector<2x8xf32>,
    return
  }
  func.func @transform_0(%arg0: i32) -> (i32, i32, i32) {
    %c0_i32 = arith.constant 0 : i32
    %c0_i32_0 = arith.constant 0 : i32
    %c0_i32_1 = arith.constant 0 : i32
    return %arg0, %c0_i32, %c0_i32_0 : i32, i32, i32
  }
  func.func @transform_1(%arg0: i32) -> (i32, i32) {
    %c0_i32 = arith.constant 0 : i32
    %c0_i32_0 = arith.constant 0 : i32
    return %arg0, %c0_i32 : i32, i32
  }
  func.func @transform_2(%arg0: i32) -> (i32, i32) {
    %c0_i32 = arith.constant 0 : i32
    %c0_i32_0 = arith.constant 0 : i32
    return %arg0, %c0_i32 : i32, i32
  }
  func.func @transform_3(%arg0: i32) -> (i32, i32) {
    %c0_i32 = arith.constant 0 : i32
    %c0_i32_0 = arith.constant 0 : i32
    %c0_i32_1 = arith.constant 0 : i32
    return %c0_i32, %c0_i32_0 : i32, i32
  }
  func.func @transform_4(%arg0: i32) -> (i32, i32) {
    %c0_i32 = arith.constant 0 : i32
    %c0_i32_0 = arith.constant 0 : i32
    %c0_i32_1 = arith.constant 0 : i32
    return %c0_i32, %c0_i32_0 : i32, i32
  }
  func.func @transform_5(%arg0: i32) -> (i32, i32) {
    %c0_i32 = arith.constant 0 : i32
    %c0_i32_0 = arith.constant 0 : i32
    %c0_i32_1 = arith.constant 0 : i32
    return %c0_i32, %c0_i32_0 : i32, i32
  }
  func.func @transform_6(%arg0: i32) -> (i32, i32) {
    %c0_i32 = arith.constant 0 : i32
    %c0_i32_0 = arith.constant 0 : i32
    return %arg0, %c0_i32 : i32, i32
  }
}

</mosaic_0001>

<llo_original>
// kernel: dual_attention.1
$region0: #{dual_attention.1}
  #allocation0 [shape = 'u32[]', space=smem, size = 0x4, offset = 0x4, fixed_abs, tag = 'smem constant byte address 0x4 - core index']
  #allocation1 [shape = 'u32[144,128]{1,0:T(1,128)}', space=vmem, size = 0x12000, scoped, tag = 'internal scratch']
  %s0 = inlined_call_operand.vmem [shape: f32[2,8,32], index: 0, kind: input, shape index: {}]
  %s1 = inlined_call_operand.vmem [shape: f32[2,16], index: 1, kind: input, shape index: {}]
  %s2 = inlined_call_operand.vmem [shape: f32[2,16], index: 2, kind: input, shape index: {}]
  %s3 = inlined_call_operand.vmem [shape: f32[32,64], index: 3, kind: input, shape index: {}]
  %s4 = inlined_call_operand.vmem [shape: f32[16,64], index: 4, kind: input, shape index: {}]
  %s5 = inlined_call_operand.vmem [shape: f32[2,64], index: 5, kind: input, shape index: {}]
  %s6 = inlined_call_operand.vmem [shape: f32[2,80], index: 6, kind: output, shape index: {}]
  %s7 = sld [smem:[#allocation0]]
  $region34: #{dual_attention.1} parent=0
    _
  %s9 = ssub.s32 1, %s7
  %s10 = scalar_select 0, %s9, %s7
  // Predicated region
  $region2: #{dual_attention.1} parent=0 // pred_check
    _
  $region3: #{dual_attention.1} parent=0 // pred_check_branch
    %12 = sbr.rel (0) target = $region5
  $region4: #{dual_attention.1} parent=0 // pred_region
    _
  $region5: #{dual_attention.1} parent=0 // pred_fallthru
    _
  // Predicated region
  $region6: #{dual_attention.1} parent=0 // pred_check
    _
  $region7: #{dual_attention.1} parent=0 // pred_check_branch
    %14 = sbr.rel (0) target = $region9
  $region8: #{dual_attention.1} parent=0 // pred_region
    _
  $region9: #{dual_attention.1} parent=0 // pred_fallthru
    _
  // Predicated region
  $region10: #{dual_attention.1} parent=0 // pred_check
    _
  $region11: #{dual_attention.1} parent=0 // pred_check_branch
    %16 = sbr.rel (0) target = $region13
  $region12: #{dual_attention.1} parent=0 // pred_region
    _
  $region13: #{dual_attention.1} parent=0 // pred_fallthru
    _
  // Predicated region
  $region14: #{dual_attention.1} parent=0 // pred_check
    _
  $region15: #{dual_attention.1} parent=0 // pred_check_branch
    %18 = sbr.rel (0) target = $region17
  $region16: #{dual_attention.1} parent=0 // pred_region
    _
  $region17: #{dual_attention.1} parent=0 // pred_fallthru
    _
  // Predicated region
  $region18: #{dual_attention.1} parent=0 // pred_check
    _
  $region19: #{dual_attention.1} parent=0 // pred_check_branch
    %20 = sbr.rel (0) target = $region21
  $region20: #{dual_attention.1} parent=0 // pred_region
    _
  $region21: #{dual_attention.1} parent=0 // pred_fallthru
    _
  // Predicated region
  $region22: #{dual_attention.1} parent=0 // pred_check
    _
  $region23: #{dual_attention.1} parent=0 // pred_check_branch
    %22 = sbr.rel (0) target = $region25
  $region24: #{dual_attention.1} parent=0 // pred_region
    _
  $region25: #{dual_attention.1} parent=0 // pred_fallthru
    _
  %v23 = vld [vmem:[%s0] sm:$0xff]
  %v24 = vld [vmem:[%s0 + $0x8] sm:$0xff]
  %v25 = vld [vmem:[%s3] sm:$0xff]
  %v26 = vld [vmem:[%s3 + $0x8] sm:$0xff]
  %v27 = vld [vmem:[%s3 + $0x10] sm:$0xff]
  %v28 = vld [vmem:[%s3 + $0x18] sm:$0xff]
  %vm29 = vcmask 261120
  %v31 = vsel %vm29, %v23, 0
  %v34 = vsel %vm29, %v24, 0
  %36 = vmatprep.subr.mxu0 0.0
  %37 = vmatpush1.msra.mxu0 %v25
  %38 = vmatprep.subr.mxu0 0.0
  %39 = vmatpush1.msra.mxu0 %v26
  %40 = vmatprep.subr.mxu0 0.0
  %41 = vmatpush1.msra.mxu0 %v27
  %42 = vmatprep.subr.mxu0 0.0
  %43 = vmatpush1.msra.mxu0 %v28
  %44 = vmatprep.subr.mxu0 0.0
  %45 = vmatpush1.msra.mxu0 0.0
  %46 = vmatprep.subr.mxu0 0.0
  %47 = vmatpush1.msra.mxu0 0.0
  %48 = vmatprep.subr.mxu0 0.0
  %49 = vmatpush1.msra.mxu0 0.0
  %50 = vmatprep.subr.mxu0 0.0
  %51 = vmatpush1.msra.mxu0 0.0
  %52 = vmatprep.subr.mxu0 0.0
  %53 = vmatpush1.msra.mxu0 0.0
  %54 = vmatprep.subr.mxu0 0.0
  %55 = vmatpush1.msra.mxu0 0.0
  %56 = vmatprep.subr.mxu0 0.0
  %57 = vmatpush1.msra.mxu0 0.0
  %58 = vmatprep.subr.mxu0 0.0
  %59 = vmatpush1.msra.mxu0 0.0
  %60 = vmatprep.subr.mxu0 0.0
  %61 = vmatpush1.msra.mxu0 0.0
  %62 = vmatprep.subr.mxu0 0.0
  %63 = vmatpush1.msra.mxu0 0.0
  %64 = vmatprep.subr.mxu0 0.0
  %65 = vmatpush1.msra.mxu0 0.0
  %66 = vmatprep.subr.mxu0 0.0
  %67 = vmatpush1.msra.mxu0 0.0
  %68 = vmatprep.subr.mxu0 0.0
  %69 = vmatpush1.msra.mxu0 0.0
  %70 = vmatprep.subr.mxu0 0.0
  %71 = vmatpush1.msra.mxu0 0.0
  %72 = vmatprep.subr.mxu0 0.0
  %73 = vmatpush1.msra.mxu0 0.0
  %74 = vmatprep.subr.mxu0 0.0
  %75 = vmatpush1.msra.mxu0 0.0
  %76 = vmatprep.subr.mxu0 0.0
  %77 = vmatpush1.msra.mxu0 0.0
  %78 = vmatprep.subr.mxu0 0.0
  %79 = vmatpush1.msra.mxu0 0.0
  %80 = vmatprep.subr.mxu0 0.0
  %81 = vmatpush1.msra.mxu0 0.0
  %82 = vmatprep.subr.mxu0 0.0
  %83 = vmatpush1.msra.mxu0 0.0
  %84 = vmatprep.subr.mxu0 0.0
  %85 = vmatpush1.msra.mxu0 0.0
  %86 = vmatprep.subr.mxu0 0.0
  %87 = vmatpush1.msra.mxu0 0.0
  %88 = vmatprep.subr.mxu0 0.0
  %89 = vmatpush1.msra.mxu0 0.0
  %90 = vmatprep.subr.mxu0 0.0
  %91 = vmatpush1.msra.mxu0 0.0
  %92 = vmatprep.subr.mxu0 0.0
  %93 = vmatpush1.msra.mxu0 0.0
  %94 = vmatprep.subr.mxu0 0.0
  %95 = vmatpush1.msra.mxu0 0.0
  %96 = vmatprep.subr.mxu0 0.0
  %97 = vmatpush1.msra.mxu0 0.0
  %98 = vmatprep.subr.mxu0 0.0
  %99 = vmatpush1.msra.mxu0 0.0
  %100 = vmatprep.mubr.f32.mxu0 0.0
  %101 = vmatmul.mubr.f32.gmra.mrb[0].mxu0 %v31
  %v102 = vpop.f32.mrb[0].mxu0
  %v103 = vadd.f32 0.0, %v102
  %v104 = vpop.f32.mrb[0].mxu0
  %105 = vmatprep.mubr.f32.mxu0 0.0
  %106 = vmatmul.mubr.f32.gmra.mrb[0].mxu0 %v34
  %v107 = vpop.f32.mrb[0].mxu0
  %v108 = vadd.f32 0.0, %v107
  %v109 = vpop.f32.mrb[0].mxu0
  %110 = vdwg.mxu0
  %v111 = vld [vmem:[%s1] sm:$0x3]
  %v112 = vld [vmem:[%s4] sm:$0xff]
  %v113 = vld [vmem:[%s4 + $0x8] sm:$0xff]
  %vm114 = vcmask 130048
  %v116 = vsel %vm114, %v111, 0
  %118 = vmatprep.subr.mxu0 0.0
  %119 = vmatpush1.msra.mxu0 %v112
  %120 = vmatprep.subr.mxu0 0.0
  %121 = vmatpush1.msra.mxu0 %v113
  %122 = vmatprep.subr.mxu0 0.0
  %123 = vmatpush1.msra.mxu0 0.0
  %124 = vmatprep.subr.mxu0 0.0
  %125 = vmatpush1.msra.mxu0 0.0
  %126 = vmatprep.subr.mxu0 0.0
  %127 = vmatpush1.msra.mxu0 0.0
  %128 = vmatprep.subr.mxu0 0.0
  %129 = vmatpush1.msra.mxu0 0.0
  %130 = vmatprep.subr.mxu0 0.0
  %131 = vmatpush1.msra.mxu0 0.0
  %132 = vmatprep.subr.mxu0 0.0
  %133 = vmatpush1.msra.mxu0 0.0
  %134 = vmatprep.subr.mxu0 0.0
  %135 = vmatpush1.msra.mxu0 0.0
  %136 = vmatprep.subr.mxu0 0.0
  %137 = vmatpush1.msra.mxu0 0.0
  %138 = vmatprep.subr.mxu0 0.0
  %139 = vmatpush1.msra.mxu0 0.0
  %140 = vmatprep.subr.mxu0 0.0
  %141 = vmatpush1.msra.mxu0 0.0
  %142 = vmatprep.subr.mxu0 0.0
  %143 = vmatpush1.msra.mxu0 0.0
  %144 = vmatprep.subr.mxu0 0.0
  %145 = vmatpush1.msra.mxu0 0.0
  %146 = vmatprep.subr.mxu0 0.0
  %147 = vmatpush1.msra.mxu0 0.0
  %148 = vmatprep.subr.mxu0 0.0
  %149 = vmatpush1.msra.mxu0 0.0
  %150 = vmatprep.subr.mxu0 0.0
  %151 = vmatpush1.msra.mxu0 0.0
  %152 = vmatprep.subr.mxu0 0.0
  %153 = vmatpush1.msra.mxu0 0.0
  %154 = vmatprep.subr.mxu0 0.0
  %155 = vmatpush1.msra.mxu0 0.0
  %156 = vmatprep.subr.mxu0 0.0
  %157 = vmatpush1.msra.mxu0 0.0
  %158 = vmatprep.subr.mxu0 0.0
  %159 = vmatpush1.msra.mxu0 0.0
  %160 = vmatprep.subr.mxu0 0.0
  %161 = vmatpush1.msra.mxu0 0.0
  %162 = vmatprep.subr.mxu0 0.0
  %163 = vmatpush1.msra.mxu0 0.0
  %164 = vmatprep.subr.mxu0 0.0
  %165 = vmatpush1.msra.mxu0 0.0
  %166 = vmatprep.subr.mxu0 0.0
  %167 = vmatpush1.msra.mxu0 0.0
  %168 = vmatprep.subr.mxu0 0.0
  %169 = vmatpush1.msra.mxu0 0.0
  %170 = vmatprep.subr.mxu0 0.0
  %171 = vmatpush1.msra.mxu0 0.0
  %172 = vmatprep.subr.mxu0 0.0
  %173 = vmatpush1.msra.mxu0 0.0
  %174 = vmatprep.subr.mxu0 0.0
  %175 = vmatpush1.msra.mxu0 0.0
  %176 = vmatprep.subr.mxu0 0.0
  %177 = vmatpush1.msra.mxu0 0.0
  %178 = vmatprep.subr.mxu0 0.0
  %179 = vmatpush1.msra.mxu0 0.0
  %180 = vmatprep.subr.mxu0 0.0
  %181 = vmatpush1.msra.mxu0 0.0
  %182 = vmatprep.mubr.f32.mxu0 0.0
  %183 = vmatmul.mubr.f32.gmra.mrb[0].mxu0 %v116
  %v184 = vpop.f32.mrb[0].mxu0
  %v185 = vadd.f32 0.0, %v184
  %v186 = vpop.f32.mrb[0].mxu0
  %187 = vdwg.mxu0
  %v190 = vunpack.c.l.s4 1966171168
  %v191 = vunpack.c.0.s8 %v190
  %v192 = vlaneseq
  %v193 = vshrl.u32 %v192, 7
  %v194 = vsub.s32 %v191, %v193
  %v195 = vrot.slane %v185, %v194
  %v196 = vcombine.high %v195, %v195
  %v198 = vunpack.c.l.s4 1966171168
  %v199 = vunpack.c.0.s8 %v198
  %v200 = vlaneseq
  %v201 = vshrl.u32 %v200, 7
  %v202 = vsub.s32 %v199, %v201
  %v203 = vrot.slane %v195, %v202
  %v205 = vunpack.c.l.s4 1966171168
  %v206 = vunpack.c.0.s8 %v205
  %v207 = vlaneseq
  %v208 = vshrl.u32 %v207, 7
  %v209 = vsub.s32 %v206, %v208
  %v210 = vrot.slane %v196, %v209
  %v211 = vlaneseq
  %v212 = vshrl.u32 %v211, 7
  %v213 = vsub.s32 0, %v212
  %v214 = vrot.slane %v203, %v213
  %v215 = vlaneseq
  %v216 = vshrl.u32 %v215, 7
  %v217 = vsub.s32 0, %v216
  %v218 = vrot.slane %v210, %v217
  %v221 = vadd.f32 %v103, %v214
  %v222 = vadd.f32 %v108, %v218
  %v223 = vtanh.pop %v221
  %v224 = vtanh.pop %v222
  %v225 = vld [vmem:[%s5] sm:$0x1]
  %v226 = vld [vmem:[%s5 + $0x1] sm:$0x1]
  %v227 = vlaneseq
  %v228 = vshrl.u32 %v227, 7
  %v229 = vsub.s32 0, %v228
  %v230 = vrot.slane %v225, %v229
  %v231 = vmul.f32 %v223, %v230
  %v232 = vmul.f32 %v224, %v230
  %vm233 = vcmask 523264
  %v234 = vsel %vm233, %v231, 0.0
  %235 = vadd.xlane.f32.xlu0 %v234
  %v236 = vpop.xlane.xlu0 %235
  %v237 = vsel %vm233, %v232, 0.0
  %238 = vadd.xlane.f32.xlu0 %v237
  %v239 = vpop.xlane.xlu0 %238
  %v240 = vlaneseq
  %v241 = vshrl.u32 %v240, 7
  %v242 = vsub.s32 0, %v241
  %v243 = vrot.slane %v226, %v242
  %v244 = vmul.f32 %v223, %v243
  %v245 = vmul.f32 %v224, %v243
  %v246 = vsel %vm233, %v244, 0.0
  %247 = vadd.xlane.f32.xlu0 %v246
  %v248 = vpop.xlane.xlu0 %247
  %v249 = vsel %vm233, %v245, 0.0
  %250 = vadd.xlane.f32.xlu0 %v249
  %v251 = vpop.xlane.xlu0 %250
  %v252 = vld [vmem:[%s2] sm:$0x3]
  %vm253 = vcmp.gt.f32.partialorder %v252, 0.5
  %v256 = vlaneseq
  %v257 = vand.u32 %v256, 127
  %v258 = vlaneseq
  %v259 = vshrl.u32 %v258, 7
  %v260 = vsub.s32 %v257, %v259
  %v261 = vrot.slane %v236, %v260
  %v262 = vlaneseq
  %v263 = vshrl.u32 %v262, 7
  %v264 = vsub.s32 %v257, %v263
  %v265 = vrot.slane %v239, %v264
  %vm266 = vcmask 1041409
  %v267 = vsel %vm266, %v265, %v261
  %v269 = vsel %vm253, %v267, -inf
  %vm270 = vcmask 58368
  %v271 = vsel %vm270, %v269, -inf
  %272 = vmax.xlane.f32.xlu0 %v271
  %v273 = vpop.xlane.xlu0 %272
  %v274 = vsub.f32 %v269, %v273
  %v275 = vmul.f32 %v274, 1.442695
  %v276 = vpow.pop %v275
  %v277 = vsel %vm270, %v276, 0.0
  %278 = vadd.xlane.f32.xlu0 %v277
  %v279 = vpop.xlane.xlu0 %278
  %v280 = vrcp.pop %v279
  %v281 = vmul.f32 %v276, %v280
  %v282 = vsel %vm253, %v281, 0.0
  %v285 = vadd.s32 %v257, 4294967288
  %v286 = vlaneseq
  %v287 = vshrl.u32 %v286, 7
  %v288 = vsub.s32 %v285, %v287
  %v289 = vrot.slane %v248, %v288
  %v290 = vlaneseq
  %v291 = vshrl.u32 %v290, 7
  %v292 = vsub.s32 %v285, %v291
  %v293 = vrot.slane %v251, %v292
  %v294 = vsel %vm266, %v293, %v289
  %v296 = vsel %vm253, %v294, -inf
  %vm297 = vcmask 123968
  %v298 = vsel %vm297, %v296, -inf
  %299 = vmax.xlane.f32.xlu0 %v298
  %v300 = vpop.xlane.xlu0 %299
  %v301 = vsub.f32 %v296, %v300
  %v302 = vmul.f32 %v301, 1.442695
  %v303 = vpow.pop %v302
  %305 = vrot.lane.b32.xlu0 %v303, 120
  %v306 = vpop.permute.xlu0 %305
  %v308 = vsel %vm270, %v306, 0.0
  %309 = vadd.xlane.f32.xlu0 %v308
  %v310 = vpop.xlane.xlu0 %309
  %v311 = vrcp.pop %v310
  %v312 = vmul.f32 %v303, %v311
  %v313 = vsel %vm253, %v312, 0.0
  %v314 = vlaneseq
  %v315 = vshrl.u32 %v314, 7
  %v316 = vsub.s32 0, %v315
  %v317 = vrot.slane %v282, %v316
  %319 = vbcast.lane.b32.xlu0 %v317, 256
  %v320 = vpop.permute.xlu0 %319
  %v321 = vlaneseq
  %v322 = vshrl.u32 %v321, 7
  %v323 = vsub.s32 1, %v322
  %v324 = vrot.slane %v282, %v323
  %326 = vbcast.lane.b32.xlu0 %v324, 256
  %v327 = vpop.permute.xlu0 %326
  %v328 = vmul.f32 %v320, %v23
  %v329 = vmul.f32 %v327, %v24
  %v330 = vsel %vm29, %v328, 0.0
  %v331 = vrot.slane %v330, 4
  %v332 = vadd.f32 %v330, %v331
  %v333 = vrot.slane %v332, 2
  %v334 = vadd.f32 %v332, %v333
  %v335 = vrot.slane %v334, 1
  %v336 = vadd.f32 %v334, %v335
  %v337 = vsel %vm29, %v329, 0.0
  %v338 = vrot.slane %v337, 4
  %v339 = vadd.f32 %v337, %v338
  %v340 = vrot.slane %v339, 2
  %v341 = vadd.f32 %v339, %v340
  %v342 = vrot.slane %v341, 1
  %v343 = vadd.f32 %v341, %v342
  %v344 = vlaneseq
  %v345 = vshrl.u32 %v344, 7
  %v346 = vsub.s32 0, %v345
  %v347 = vrot.slane %v313, %v346
  %s349 = sor.u32 256, 8
  %350 = vbcast.lane.b32.xlu0 %v347, %s349
  %v351 = vpop.permute.xlu0 %350
  %v352 = vlaneseq
  %v353 = vshrl.u32 %v352, 7
  %v354 = vsub.s32 1, %v353
  %v355 = vrot.slane %v313, %v354
  %s357 = sor.u32 256, 8
  %358 = vbcast.lane.b32.xlu0 %v355, %s357
  %v359 = vpop.permute.xlu0 %358
  %v360 = vmul.f32 %v351, %v23
  %v361 = vmul.f32 %v359, %v24
  %v362 = vsel %vm29, %v360, 0.0
  %v363 = vrot.slane %v362, 4
  %v364 = vadd.f32 %v362, %v363
  %v365 = vrot.slane %v364, 2
  %v366 = vadd.f32 %v364, %v365
  %v367 = vrot.slane %v366, 1
  %v368 = vadd.f32 %v366, %v367
  %v369 = vsel %vm29, %v361, 0.0
  %v370 = vrot.slane %v369, 4
  %v371 = vadd.f32 %v369, %v370
  %v372 = vrot.slane %v371, 2
  %v373 = vadd.f32 %v371, %v372
  %v374 = vrot.slane %v373, 1
  %v375 = vadd.f32 %v373, %v374
  %v378 = vsel %vm266, %v343, %v336
  %vm380 = vcmask 254976
  %381 = vst.msk [vmem:[%s6] sm:$0x3] %vm380, %v378
  %v384 = vsel %vm266, %v375, %v368
  %385 = vrot.lane.b32.xlu0 %v384, 32
  %v386 = vpop.permute.xlu0 %385
  %vm388 = vcmask 517376
  %389 = vst.msk [vmem:[%s6] sm:$0x3] %vm388, %v386
  %391 = vrot.lane.b32.xlu0 %v282, 64
  %v392 = vpop.permute.xlu0 %391
  %vm394 = vcmask 583168
  %395 = vst.msk [vmem:[%s6] sm:$0x3] %vm394, %v392
  %397 = vrot.lane.b32.xlu0 %v313, 64
  %v398 = vpop.permute.xlu0 %397
  %vm400 = vcmask 648768
  %401 = vst.msk [vmem:[%s6] sm:$0x3] %vm400, %v398
  // Predicated region
  $region26: #{dual_attention.1} parent=0 // pred_check
    _
  $region27: #{dual_attention.1} parent=0 // pred_check_branch
    %403 = sbr.rel (0) target = $region29
  $region28: #{dual_attention.1} parent=0 // pred_region
    _
  $region29: #{dual_attention.1} parent=0 // pred_fallthru
    _
  // Predicated region
  $region30: #{dual_attention.1} parent=0 // pred_check
    _
  $region31: #{dual_attention.1} parent=0 // pred_check_branch
    %405 = sbr.rel (0) target = $region33
  $region32: #{dual_attention.1} parent=0 // pred_region
    _
  $region33: #{dual_attention.1} parent=0 // pred_fallthru
    _

</llo_original>
